<compile_context>
chip_gen: v7x
topology: tpu7x:2x2x1
jax: 0.10.0
libtpu: 0.0.40
codegen_flags: <defaults>
</compile_context>

<pallas_src>
import jax
import jax.numpy as jnp
from jax import lax
from jax.experimental import pallas as pl
from jax.experimental.pallas import tpu as pltpu


def snakenet_kernel(x_ref, w1_ref, b1_ref, w2_ref, b2_ref, w3_ref, b3_ref, o_ref):
    # x_ref: (TB, in) batch-major tile (caller layout); weights native (out, in);
    # biases as (out, 1) columns; all intermediates are (feat, TB) -> lane-dense.
    x = x_ref[...].astype(w1_ref.dtype)          # optional f32->bf16 cast in-kernel

    # Layer 1: (h1, in) x (TB, in)^T -> (h1, TB)   [contract the shared `in` axis]
    y = lax.dot_general(w1_ref[...], x,
                        dimension_numbers=(((1,), (1,)), ((), ())),
                        preferred_element_type=jnp.float32)
    y = jnp.maximum(y + b1_ref[...], 0.0)

    # Layer 2: (h2, h1) x (h1, TB) -> (h2, TB)
    y = lax.dot_general(w2_ref[...], y.astype(w2_ref.dtype),
                        dimension_numbers=(((1,), (0,)), ((), ())),
                        preferred_element_type=jnp.float32)
    y = jnp.maximum(y + b2_ref[...], 0.0)

    # Layer 3: (out, h2) x (h2, TB) -> (out, TB), then sigmoid (f32 EUP)
    y = lax.dot_general(w3_ref[...], y.astype(w3_ref.dtype),
                        dimension_numbers=(((1,), (0,)), ((), ())),
                        preferred_element_type=jnp.float32)
    o_ref[...] = jax.nn.sigmoid(y + b3_ref[...]).astype(o_ref.dtype)


def prepare_params(params, compute_dtype=jnp.float32):
    """One-time layout prep from PyTorch nn.Linear params.

    Weights keep their native (out, in) layout (no transpose needed any more),
    optionally cast to bf16 for the MXU.  Biases become (out, 1) f32 columns
    that broadcast along the lane (batch) axis; elementwise math stays f32
    (v5e has no bf16 VPU/EUP).
    """
    def w(k):
        return jnp.asarray(params[k]).astype(compute_dtype)

    def b(k):
        return jnp.asarray(params[k]).reshape(-1, 1).astype(jnp.float32)

    return {"w1": w("w1"), "b1": b("b1"),
            "w2": w("w2"), "b2": b("b2"),
            "w3": w("w3"), "b3": b("b3")}


def _pick_tile(batch, block_batch):
    """Batch tile (lane axis of the output).  Multiple of 256 when tiled; keeps
    >=2 blocks for the v7x megacore whenever the batch is large enough."""
    if batch <= 512:
        return batch                       # single block; block dims == full dims
    block_batch = max(256, (block_batch // 256) * 256)
    half = -(-batch // 2)                  # ceil(batch / 2)
    half = ((half + 255) // 256) * 256     # lane/MXU-friendly multiple of 256
    return min(block_batch, half)


def snakenet_forward(x, prep, *, block_batch=4096):
    """x: (B, in_feature) f32 (any float dtype); prep: output of prepare_params().

    Returns (B, out_feature) f32, matching the PyTorch module.
    """
    B, in_f = x.shape
    h1, _ = prep["w1"].shape
    h2, _ = prep["w2"].shape
    out_f, _ = prep["w3"].shape

    tb = _pick_tile(B, block_batch)
    n_blocks = pl.cdiv(B, tb)              # ragged tail handled by Pallas

    def full_spec(shape):
        # Tiny weight/bias arrays: whole array resident in VMEM, constant block
        # index -> fetched once, never re-DMA'd across the batch grid.
        return pl.BlockSpec(shape, lambda i: (0, 0))

    flops = 2 * B * (in_f * h1 + h1 * h2 + h2 * out_f)
    bytes_accessed = B * (in_f + out_f) * 4 + sum(
        int(prep[k].size) * prep[k].dtype.itemsize for k in prep)

    out = pl.pallas_call(
        snakenet_kernel,
        out_shape=jax.ShapeDtypeStruct((out_f, B), jnp.float32),  # feature-major
        grid=(n_blocks,),
        in_specs=[
            pl.BlockSpec((tb, in_f), lambda i: (i, 0)),   # activations, batch-tiled
            full_spec(prep["w1"].shape), full_spec(prep["b1"].shape),
            full_spec(prep["w2"].shape), full_spec(prep["b2"].shape),
            full_spec(prep["w3"].shape), full_spec(prep["b3"].shape),
        ],
        out_specs=pl.BlockSpec((out_f, tb), lambda i: (0, i)),   # lane-dense store
        compiler_params=pltpu.CompilerParams(
            dimension_semantics=("parallel",)),                  # 2-TC shard on v7x
        cost_estimate=pl.CostEstimate(flops=flops,
                                      transcendentals=B * out_f,
                                      bytes_accessed=bytes_accessed),
    )(x, prep["w1"], prep["b1"], prep["w2"], prep["b2"], prep["w3"], prep["b3"])

    # Tiny (out_f, B) -> (B, out_f) transpose keeps the module's output contract;
    # negligible traffic vs. the input read (out_f = 4).
    return out.T


def init_params(key, in_feature=32, h1=20, h2=12, out_feature=4):
    """Deterministic synthetic parameters (PyTorch nn.Linear shapes)."""
    ks = jax.random.split(key, 6)

    def uniform(k, shape, fan_in):
        bound = 1.0 / jnp.sqrt(fan_in)
        return jax.random.uniform(k, shape, jnp.float32, -bound, bound)

    return {
        "w1": uniform(ks[0], (h1, in_feature), in_feature),
        "b1": uniform(ks[1], (h1,), in_feature),
        "w2": uniform(ks[2], (h2, h1), h1),
        "b2": uniform(ks[3], (h2,), h1),
        "w3": uniform(ks[4], (out_feature, h2), h2),
        "b3": uniform(ks[5], (out_feature,), h2),
    }


def reference_forward(x, p):
    y = jnp.maximum(x @ p["w1"].T + p["b1"], 0.0)
    y = jnp.maximum(y @ p["w2"].T + p["b2"], 0.0)
    return jax.nn.sigmoid(y @ p["w3"].T + p["b3"])


if __name__ == "__main__":
    key = jax.random.PRNGKey(0)
    k_param, k_x, k_pop = jax.random.split(key, 3)

    B, IN_FEATURE = 8, 32
    params = init_params(k_param, in_feature=IN_FEATURE)

    # --- small-batch correctness check (f32 end-to-end, tight tolerance) ---
    x = jax.random.normal(k_x, (B, IN_FEATURE), dtype=jnp.float32)
    prep_f32 = prepare_params(params, compute_dtype=jnp.float32)
    out = jax.block_until_ready(snakenet_forward(x, prep_f32))
    ref = reference_forward(x, params)
    assert out.shape == (B, 4), out.shape
    assert jnp.allclose(out, ref, atol=1e-5, rtol=1e-5), "f32 mismatch vs reference"

    # --- population-scale batch: multi-block grid + bf16 MXU path -----------
    # (bf16 rounds both weights and the re-cast inter-layer activations; looser
    #  tolerance documents that second rounding.)
    POP = 1024
    x_pop = jax.random.normal(k_pop, (POP, IN_FEATURE), dtype=jnp.float32)
    prep_bf16 = prepare_params(params, compute_dtype=jnp.bfloat16)
    out_pop = jax.block_until_ready(snakenet_forward(x_pop, prep_bf16))
    ref_pop = reference_forward(x_pop, params)
    assert out_pop.shape == (POP, 4), out_pop.shape
    assert jnp.allclose(out_pop, ref_pop, atol=3e-2, rtol=3e-2), \
        "bf16 batched mismatch vs reference"

    # --- ragged batch (tail block handled by Pallas, no wrapper pad/slice) ---
    x_rag = jax.random.normal(k_pop, (1000, IN_FEATURE), dtype=jnp.float32)
    out_rag = jax.block_until_ready(snakenet_forward(x_rag, prep_f32))
    ref_rag = reference_forward(x_rag, params)
    assert out_rag.shape == (1000, 4), out_rag.shape
    assert jnp.allclose(out_rag, ref_rag, atol=1e-5, rtol=1e-5), \
        "ragged-tail mismatch vs reference"

    print("KERNEL_OK")
</pallas_src>

<mosaic_0001>
module attributes {stable_mosaic.version = 11 : i64} {
  func.func @snakenet_kernel(%arg0: i32, %arg1: memref<8x32xf32, #tpu.memory_space<vmem>>, %arg2: memref<20x32xf32, #tpu.memory_space<vmem>>, %arg3: memref<20x1xf32, #tpu.memory_space<vmem>>, %arg4: memref<12x20xf32, #tpu.memory_space<vmem>>, %arg5: memref<12x1xf32, #tpu.memory_space<vmem>>, %arg6: memref<4x12xf32, #tpu.memory_space<vmem>>, %arg7: memref<4x1xf32, #tpu.memory_space<vmem>>, %arg8: memref<4x8xf32, #tpu.memory_space<vmem>>) attributes {dimension_semantics = [#tpu.dimension_semantics<parallel>], iteration_bounds = array<i64: 1>, scalar_prefetch = 0 : i64, scratch_operands = 0 : i64, tpu.core_type = #tpu.core_type<tc>, window_params = [{transform_indices = @transform_0, window_bounds = array<i64: 8, 32>}, {pipeline_mode = #tpu.pipeline_mode<synchronous>, transform_indices = @transform_1, window_bounds = array<i64: 20, 32>}, {pipeline_mode = #tpu.pipeline_mode<synchronous>, transform_indices = @transform_2, window_bounds = array<i64: 20, 1>}, {pipeline_mode = #tpu.pipeline_mode<synchronous>, transform_indices = @transform_3, window_bounds = array<i64: 12, 20>}, {pipeline_mode = #tpu.pipeline_mode<synchronous>, transform_indices = @transform_4, window_bounds = array<i64: 12, 1>}, {pipeline_mode = #tpu.pipeline_mode<synchronous>, transform_indices = @transform_5, window_bounds = array<i64: 4, 12>}, {pipeline_mode = #tpu.pipeline_mode<synchronous>, transform_indices = @transform_6, window_bounds = array<i64: 4, 1>}, {transform_indices = @transform_7, window_bounds = array<i64: 4, 8>}]} {
    %c0 = arith.constant 0 : index
    %c0_0 = arith.constant 0 : index
    %0 = vector.load %arg1[%c0, %c0_0] : memref<8x32xf32, #tpu.memory_space<vmem>>, vector<8x32xf32>
    %c0_1 = arith.constant 0 : index
    %c0_2 = arith.constant 0 : index
    %1 = vector.load %arg2[%c0_1, %c0_2] : memref<20x32xf32, #tpu.memory_space<vmem>>, vector<20x32xf32>
    %cst = arith.constant dense<0.000000e+00> : vector<20x8xf32>
    %2 = tpu.matmul %1, %0, %cst {dimension_numbers = #tpu.dot_dimension_numbers<[1], [1], [0], [0], [0, 0, 1, 0], [], []>} : vector<20x32xf32>, vector<8x32xf32>, vector<20x8xf32> -> vector<20x8xf32>
    %c0_3 = arith.constant 0 : index
    %c0_4 = arith.constant 0 : index
    %3 = vector.load %arg3[%c0_3, %c0_4] : memref<20x1xf32, #tpu.memory_space<vmem>>, vector<20x1xf32>
    %4 = vector.broadcast %3 : vector<20x1xf32> to vector<20x8xf32>
    %5 = arith.addf %2, %4 : vector<20x8xf32>
    %cst_5 = arith.constant 0.000000e+00 : f32
    %6 = vector.broadcast %cst_5 : f32 to vector<20x8xf32>
    %7 = arith.maximumf %5, %6 : vector<20x8xf32>
    %c0_6 = arith.constant 0 : index
    %c0_7 = arith.constant 0 : index
    %8 = vector.load %arg4[%c0_6, %c0_7] : memref<12x20xf32, #tpu.memory_space<vmem>>, vector<12x20xf32>
    %cst_8 = arith.constant dense<0.000000e+00> : vector<12x8xf32>
    %9 = tpu.matmul %8, %7, %cst_8 {dimension_numbers = #tpu.dot_dimension_numbers<[1], [0], [0], [1], [0, 0, 1, 1], [], []>} : vector<12x20xf32>, vector<20x8xf32>, vector<12x8xf32> -> vector<12x8xf32>
    %c0_9 = arith.constant 0 : index
    %c0_10 = arith.constant 0 : index
    %10 = vector.load %arg5[%c0_9, %c0_10] : memref<12x1xf32, #tpu.memory_space<vmem>>, vector<12x1xf32>
    %11 = vector.broadcast %10 : vector<12x1xf32> to vector<12x8xf32>
    %12 = arith.addf %9, %11 : vector<12x8xf32>
    %cst_11 = arith.constant 0.000000e+00 : f32
    %13 = vector.broadcast %cst_11 : f32 to vector<12x8xf32>
    %14 = arith.maximumf %12, %13 : vector<12x8xf32>
    %c0_12 = arith.constant 0 : index
    %c0_13 = arith.constant 0 : index
    %15 = vector.load %arg6[%c0_12, %c0_13] : memref<4x12xf32, #tpu.memory_space<vmem>>, vector<4x12xf32>
    %cst_14 = arith.constant dense<0.000000e+00> : vector<4x8xf32>
    %16 = tpu.matmul %15, %14, %cst_14 {dimension_numbers = #tpu.dot_dimension_numbers<[1], [0], [0], [1], [0, 0, 1, 1], [], []>} : vector<4x12xf32>, vector<12x8xf32>, vector<4x8xf32> -> vector<4x8xf32>
    %c0_15 = arith.constant 0 : index
    %c0_16 = arith.constant 0 : index
    %17 = vector.load %arg7[%c0_15, %c0_16] : memref<4x1xf32, #tpu.memory_space<vmem>>, vector<4x1xf32>
    %18 = vector.broadcast %17 : vector<4x1xf32> to vector<4x8xf32>
    %19 = arith.addf %16, %18 : vector<4x8xf32>
    %20 = arith.negf %19 : vector<4x8xf32>
    %21 = math.exp %20 : vector<4x8xf32>
    %cst_17 = arith.constant 1.000000e+00 : f32
    %22 = vector.broadcast %cst_17 : f32 to vector<4x8xf32>
    %23 = arith.addf %22, %21 : vector<4x8xf32>
    %24 = arith.divf %22, %23 : vector<4x8xf32>
    %c0_18 = arith.constant 0 : index
    %c0_19 = arith.constant 0 : index
    %25 = vector.load %arg8[%c0_18, %c0_19] : memref<4x8xf32, #tpu.memory_space<vmem>>, vector<4x8xf32>
    tpu.vector_store %arg8[%c0_18, %c0_19], %24 {strides = array<i32>} : memref<4x8xf32, #tpu.memory_space<vmem>>, vector<4x8xf32>,
    return
  }
  func.func @transform_0(%arg0: i32) -> (i32, i32) {
    %c0_i32 = arith.constant 0 : i32
    %c0_i32_0 = arith.constant 0 : i32
    return %arg0, %c0_i32 : i32, i32
  }
  func.func @transform_1(%arg0: i32) -> (i32, i32) {
    %c0_i32 = arith.constant 0 : i32
    %c0_i32_0 = arith.constant 0 : i32
    %c0_i32_1 = arith.constant 0 : i32
    return %c0_i32, %c0_i32_0 : i32, i32
  }
  func.func @transform_2(%arg0: i32) -> (i32, i32) {
    %c0_i32 = arith.constant 0 : i32
    %c0_i32_0 = arith.constant 0 : i32
    %c0_i32_1 = arith.constant 0 : i32
    return %c0_i32, %c0_i32_0 : i32, i32
  }
  func.func @transform_3(%arg0: i32) -> (i32, i32) {
    %c0_i32 = arith.constant 0 : i32
    %c0_i32_0 = arith.constant 0 : i32
    %c0_i32_1 = arith.constant 0 : i32
    return %c0_i32, %c0_i32_0 : i32, i32
  }
  func.func @transform_4(%arg0: i32) -> (i32, i32) {
    %c0_i32 = arith.constant 0 : i32
    %c0_i32_0 = arith.constant 0 : i32
    %c0_i32_1 = arith.constant 0 : i32
    return %c0_i32, %c0_i32_0 : i32, i32
  }
  func.func @transform_5(%arg0: i32) -> (i32, i32) {
    %c0_i32 = arith.constant 0 : i32
    %c0_i32_0 = arith.constant 0 : i32
    %c0_i32_1 = arith.constant 0 : i32
    return %c0_i32, %c0_i32_0 : i32, i32
  }
  func.func @transform_6(%arg0: i32) -> (i32, i32) {
    %c0_i32 = arith.constant 0 : i32
    %c0_i32_0 = arith.constant 0 : i32
    %c0_i32_1 = arith.constant 0 : i32
    return %c0_i32, %c0_i32_0 : i32, i32
  }
  func.func @transform_7(%arg0: i32) -> (i32, i32) {
    %c0_i32 = arith.constant 0 : i32
    %c0_i32_0 = arith.constant 0 : i32
    return %c0_i32, %arg0 : i32, i32
  }
}

</mosaic_0001>

<llo_original>
// kernel: tpu_custom_call.1
$region0: #{tpu_custom_call.1}
  #allocation0 [shape = 'u32[]', space=smem, size = 0x4, offset = 0x4, fixed_abs, tag = 'smem constant byte address 0x4 - core index']
  #allocation1 [shape = 'u32[144,128]{1,0:T(1,128)}', space=vmem, size = 0x12000, scoped, tag = 'internal scratch']
  %s0 = inlined_call_operand.hbm [shape: f32[8,32], index: 0, kind: input, shape index: {}]
  %s1 = inlined_call_operand.vmem [shape: f32[20,32], index: 1, kind: input, shape index: {}]
  %s2 = inlined_call_operand.vmem [shape: f32[20,1], index: 2, kind: input, shape index: {}]
  %s3 = inlined_call_operand.vmem [shape: f32[12,20], index: 3, kind: input, shape index: {}]
  %s4 = inlined_call_operand.vmem [shape: f32[12,1], index: 4, kind: input, shape index: {}]
  %s5 = inlined_call_operand.vmem [shape: f32[4,12], index: 5, kind: input, shape index: {}]
  %s6 = inlined_call_operand.vmem [shape: f32[4,1], index: 6, kind: input, shape index: {}]
  %s7 = inlined_call_operand.hbm [shape: f32[4,8], index: 7, kind: output, shape index: {}]
  %s8 = sld [smem:[#allocation0]]
  $region42: #{tpu_custom_call.1} parent=0
    _
  %s10 = ssub.s32 1, %s8
  %s11 = scalar_select 0, %s10, %s8
  $region1: #{tpu_custom_call.1} parent=0
    #allocation2 [shape = 'u8[4096]{0}', space=vmem, size = 0x1000, scoped, tag = 'input window, operand 0, single buffered']
    #allocation3 [shape = 's32[1]{0}', space=sflag, size = 0x4, scoped, tag = 'scoped memory for tpu_custom_call.1']
    #allocation4 [shape = 's32[1]{0}', space=sflag, size = 0x4, scoped, tag = 'scoped memory for tpu_custom_call.1']
    #allocation5 [shape = 'u8[2048]{0}', space=vmem, size = 0x800, scoped, tag = 'output window, operand 0, single buffered']
    %12 = vsyncpa [#allocation3], 0
    %13 = vsyncpa [#allocation4], 0
    // Predicated region
    $region2: #{tpu_custom_call.1} parent=1 // pred_check
      _
    $region3: #{tpu_custom_call.1} parent=1 // pred_check_branch
      %15 = sbr.rel (0) target = $region5
    $region4: #{tpu_custom_call.1} parent=1 // pred_region
      %s17 = ssub.s32 128, 128
      %18 = vsyncadd [#allocation3], %s17
      %s20 = sshll.u32 [#allocation2], 4
      %s21 = int_to_ptr.vmem [resolvable:$true] %s20
      %23 = dma.hbm_to_vmem [thread:$0]  %s0, 128, %s21, [#allocation3]
    $region5: #{tpu_custom_call.1} parent=1 // pred_fallthru
      _
    // Predicated region
    $region6: #{tpu_custom_call.1} parent=1 // pred_check
      _
    $region7: #{tpu_custom_call.1} parent=1 // pred_check_branch
      %25 = sbr.rel (0) target = $region9
    $region8: #{tpu_custom_call.1} parent=1 // pred_region
      _
    $region9: #{tpu_custom_call.1} parent=1 // pred_fallthru
      _
    // Predicated region
    $region10: #{tpu_custom_call.1} parent=1 // pred_check
      _
    $region11: #{tpu_custom_call.1} parent=1 // pred_check_branch
      %27 = sbr.rel (0) target = $region13
    $region12: #{tpu_custom_call.1} parent=1 // pred_region
      _
    $region13: #{tpu_custom_call.1} parent=1 // pred_fallthru
      _
    // Predicated region
    $region14: #{tpu_custom_call.1} parent=1 // pred_check
      _
    $region15: #{tpu_custom_call.1} parent=1 // pred_check_branch
      %29 = sbr.rel (0) target = $region17
    $region16: #{tpu_custom_call.1} parent=1 // pred_region
      _
    $region17: #{tpu_custom_call.1} parent=1 // pred_fallthru
      _
    // Predicated region
    $region18: #{tpu_custom_call.1} parent=1 // pred_check
      _
    $region19: #{tpu_custom_call.1} parent=1 // pred_check_branch
      %31 = sbr.rel (0) target = $region21
    $region20: #{tpu_custom_call.1} parent=1 // pred_region
      _
    $region21: #{tpu_custom_call.1} parent=1 // pred_fallthru
      _
    // Predicated region
    $region22: #{tpu_custom_call.1} parent=1 // pred_check
      _
    $region23: #{tpu_custom_call.1} parent=1 // pred_check_branch
      %33 = sbr.rel (0) target = $region25
    $region24: #{tpu_custom_call.1} parent=1 // pred_region
      _
    $region25: #{tpu_custom_call.1} parent=1 // pred_fallthru
      _
    // Predicated region
    $region26: #{tpu_custom_call.1} parent=1 // pred_check
      _
    $region27: #{tpu_custom_call.1} parent=1 // pred_check_branch
      %35 = sbr.rel (0) target = $region29
    $region28: #{tpu_custom_call.1} parent=1 // pred_region
      _
    $region29: #{tpu_custom_call.1} parent=1 // pred_fallthru
      _
    // Predicated region
    $region30: #{tpu_custom_call.1} parent=1 // pred_check
      _
    $region31: #{tpu_custom_call.1} parent=1 // pred_check_branch
      %37 = sbr.rel (0) target = $region33
    $region32: #{tpu_custom_call.1} parent=1 // pred_region
      %38 = dma.done [#allocation3], 128
    $region33: #{tpu_custom_call.1} parent=1 // pred_fallthru
      _
    %v39 = vld [vmem:[#allocation2] sm:$0xff]
    %v40 = vld [vmem:[%s1] sm:$0xff]
    %v41 = vld [vmem:[%s1 + $0x8] sm:$0xff]
    %v42 = vld [vmem:[%s1 + $0x10] sm:$0xf]
    %v43 = vld [vmem:[%s2] sm:$0xff]
    %v44 = vld [vmem:[%s2 + $0x8] sm:$0xff]
    %v45 = vld [vmem:[%s2 + $0x10] sm:$0xf]
    %47 = vset.pattern.permute.xlu0 0
    %48 = vperm.xlu0 %47, %v43
    %v49 = vpop.permute.xlu0 %48
    %52 = vset.pattern.permute.xlu0 0
    %53 = vperm.xlu0 %52, %v44
    %v54 = vpop.permute.xlu0 %53
    %57 = vset.pattern.permute.xlu0 0
    %58 = vperm.xlu0 %57, %v45
    %v59 = vpop.permute.xlu0 %58
    %vm61 = vcmask 261120
    %v63 = vsel %vm61, %v40, 0
    %v66 = vsel %vm61, %v41, 0
    %v69 = vsel %vm61, %v42, 0
    %v72 = vsel %vm61, %v39, 0
    %74 = vmatprep.subr.mxu0 0.0
    %75 = vmatpush1.xpose.msra.mxu0 %v72
    %76 = vmatprep.subr.mxu0 0.0
    %77 = vmatpush1.xpose.msra.mxu0 0.0
    %78 = vmatprep.subr.mxu0 0.0
    %79 = vmatpush1.xpose.msra.mxu0 0.0
    %80 = vmatprep.subr.mxu0 0.0
    %81 = vmatpush1.xpose.msra.mxu0 0.0
    %82 = vmatprep.subr.mxu0 0.0
    %83 = vmatpush1.xpose.msra.mxu0 0.0
    %84 = vmatprep.subr.mxu0 0.0
    %85 = vmatpush1.xpose.msra.mxu0 0.0
    %86 = vmatprep.subr.mxu0 0.0
    %87 = vmatpush1.xpose.msra.mxu0 0.0
    %88 = vmatprep.subr.mxu0 0.0
    %89 = vmatpush1.xpose.msra.mxu0 0.0
    %90 = vmatprep.subr.mxu0 0.0
    %91 = vmatpush1.xpose.msra.mxu0 0.0
    %92 = vmatprep.subr.mxu0 0.0
    %93 = vmatpush1.xpose.msra.mxu0 0.0
    %94 = vmatprep.subr.mxu0 0.0
    %95 = vmatpush1.xpose.msra.mxu0 0.0
    %96 = vmatprep.subr.mxu0 0.0
    %97 = vmatpush1.xpose.msra.mxu0 0.0
    %98 = vmatprep.subr.mxu0 0.0
    %99 = vmatpush1.xpose.msra.mxu0 0.0
    %100 = vmatprep.subr.mxu0 0.0
    %101 = vmatpush1.xpose.msra.mxu0 0.0
    %102 = vmatprep.subr.mxu0 0.0
    %103 = vmatpush1.xpose.msra.mxu0 0.0
    %104 = vmatprep.subr.mxu0 0.0
    %105 = vmatpush1.xpose.msra.mxu0 0.0
    %106 = vmatprep.subr.mxu0 0.0
    %107 = vmatpush1.xpose.msra.mxu0 0.0
    %108 = vmatprep.subr.mxu0 0.0
    %109 = vmatpush1.xpose.msra.mxu0 0.0
    %110 = vmatprep.subr.mxu0 0.0
    %111 = vmatpush1.xpose.msra.mxu0 0.0
    %112 = vmatprep.subr.mxu0 0.0
    %113 = vmatpush1.xpose.msra.mxu0 0.0
    %114 = vmatprep.subr.mxu0 0.0
    %115 = vmatpush1.xpose.msra.mxu0 0.0
    %116 = vmatprep.subr.mxu0 0.0
    %117 = vmatpush1.xpose.msra.mxu0 0.0
    %118 = vmatprep.subr.mxu0 0.0
    %119 = vmatpush1.xpose.msra.mxu0 0.0
    %120 = vmatprep.subr.mxu0 0.0
    %121 = vmatpush1.xpose.msra.mxu0 0.0
    %122 = vmatprep.subr.mxu0 0.0
    %123 = vmatpush1.xpose.msra.mxu0 0.0
    %124 = vmatprep.subr.mxu0 0.0
    %125 = vmatpush1.xpose.msra.mxu0 0.0
    %126 = vmatprep.subr.mxu0 0.0
    %127 = vmatpush1.xpose.msra.mxu0 0.0
    %128 = vmatprep.subr.mxu0 0.0
    %129 = vmatpush1.xpose.msra.mxu0 0.0
    %130 = vmatprep.subr.mxu0 0.0
    %131 = vmatpush1.xpose.msra.mxu0 0.0
    %132 = vmatprep.subr.mxu0 0.0
    %133 = vmatpush1.xpose.msra.mxu0 0.0
    %134 = vmatprep.subr.mxu0 0.0
    %135 = vmatpush1.xpose.msra.mxu0 0.0
    %136 = vmatprep.subr.mxu0 0.0
    %137 = vmatpush1.xpose.msra.mxu0 0.0
    %138 = vmatprep.mubr.f32.mxu0 0.0
    %139 = vmatmul.mubr.f32.gmra.mrb[0].mxu0 %v63
    %v140 = vpop.f32.mrb[0].mxu0
    %v141 = vadd.f32 %v49, %v140
    %v142 = vpop.f32.mrb[0].mxu0
    %143 = vmatprep.mubr.f32.mxu0 0.0
    %144 = vmatmul.mubr.f32.gmra.mrb[0].mxu0 %v66
    %v145 = vpop.f32.mrb[0].mxu0
    %v146 = vadd.f32 %v54, %v145
    %v147 = vpop.f32.mrb[0].mxu0
    %148 = vmatprep.mubr.f32.mxu0 0.0
    %149 = vmatmul.mubr.f32.gmra.mrb[0].mxu0 %v69
    %v150 = vpop.f32.mrb[0].mxu0
    %v151 = vadd.f32 %v59, %v150
    %v152 = vpop.f32.mrb[0].mxu0
    %153 = vdwg.mxu0
    %v154 = vmax.f32 %v141, 0.0
    %v155 = vmax.f32 %v146, 0.0
    %v156 = vmax.f32 %v151, 0.0
    %v157 = vld [vmem:[%s3] sm:$0xff]
    %v158 = vld [vmem:[%s3 + $0x8] sm:$0xf]
    %v159 = vld [vmem:[%s4] sm:$0xff]
    %v160 = vld [vmem:[%s4 + $0x8] sm:$0xf]
    %162 = vset.pattern.permute.xlu0 0
    %163 = vperm.xlu0 %162, %v159
    %v164 = vpop.permute.xlu0 %163
    %167 = vset.pattern.permute.xlu0 0
    %168 = vperm.xlu0 %167, %v160
    %v169 = vpop.permute.xlu0 %168
    %vm171 = vcmask 162816
    %v173 = vsel %vm171, %v157, 0
    %v176 = vsel %vm171, %v158, 0
    %vm178 = vcmask 1043456
    %v180 = vsel %vm178, %v156, 0
    %182 = vmatprep.subr.mxu0 0.0
    %183 = vmatpush1.msra.mxu0 %v154
    %184 = vmatprep.subr.mxu0 0.0
    %185 = vmatpush1.msra.mxu0 %v155
    %186 = vmatprep.subr.mxu0 0.0
    %187 = vmatpush1.msra.mxu0 %v180
    %188 = vmatprep.subr.mxu0 0.0
    %189 = vmatpush1.msra.mxu0 0.0
    %190 = vmatprep.subr.mxu0 0.0
    %191 = vmatpush1.msra.mxu0 0.0
    %192 = vmatprep.subr.mxu0 0.0
    %193 = vmatpush1.msra.mxu0 0.0
    %194 = vmatprep.subr.mxu0 0.0
    %195 = vmatpush1.msra.mxu0 0.0
    %196 = vmatprep.subr.mxu0 0.0
    %197 = vmatpush1.msra.mxu0 0.0
    %198 = vmatprep.subr.mxu0 0.0
    %199 = vmatpush1.msra.mxu0 0.0
    %200 = vmatprep.subr.mxu0 0.0
    %201 = vmatpush1.msra.mxu0 0.0
    %202 = vmatprep.subr.mxu0 0.0
    %203 = vmatpush1.msra.mxu0 0.0
    %204 = vmatprep.subr.mxu0 0.0
    %205 = vmatpush1.msra.mxu0 0.0
    %206 = vmatprep.subr.mxu0 0.0
    %207 = vmatpush1.msra.mxu0 0.0
    %208 = vmatprep.subr.mxu0 0.0
    %209 = vmatpush1.msra.mxu0 0.0
    %210 = vmatprep.subr.mxu0 0.0
    %211 = vmatpush1.msra.mxu0 0.0
    %212 = vmatprep.subr.mxu0 0.0
    %213 = vmatpush1.msra.mxu0 0.0
    %214 = vmatprep.subr.mxu0 0.0
    %215 = vmatpush1.msra.mxu0 0.0
    %216 = vmatprep.subr.mxu0 0.0
    %217 = vmatpush1.msra.mxu0 0.0
    %218 = vmatprep.subr.mxu0 0.0
    %219 = vmatpush1.msra.mxu0 0.0
    %220 = vmatprep.subr.mxu0 0.0
    %221 = vmatpush1.msra.mxu0 0.0
    %222 = vmatprep.subr.mxu0 0.0
    %223 = vmatpush1.msra.mxu0 0.0
    %224 = vmatprep.subr.mxu0 0.0
    %225 = vmatpush1.msra.mxu0 0.0
    %226 = vmatprep.subr.mxu0 0.0
    %227 = vmatpush1.msra.mxu0 0.0
    %228 = vmatprep.subr.mxu0 0.0
    %229 = vmatpush1.msra.mxu0 0.0
    %230 = vmatprep.subr.mxu0 0.0
    %231 = vmatpush1.msra.mxu0 0.0
    %232 = vmatprep.subr.mxu0 0.0
    %233 = vmatpush1.msra.mxu0 0.0
    %234 = vmatprep.subr.mxu0 0.0
    %235 = vmatpush1.msra.mxu0 0.0
    %236 = vmatprep.subr.mxu0 0.0
    %237 = vmatpush1.msra.mxu0 0.0
    %238 = vmatprep.subr.mxu0 0.0
    %239 = vmatpush1.msra.mxu0 0.0
    %240 = vmatprep.subr.mxu0 0.0
    %241 = vmatpush1.msra.mxu0 0.0
    %242 = vmatprep.subr.mxu0 0.0
    %243 = vmatpush1.msra.mxu0 0.0
    %244 = vmatprep.subr.mxu0 0.0
    %245 = vmatpush1.msra.mxu0 0.0
    %246 = vmatprep.mubr.f32.mxu0 0.0
    %247 = vmatmul.mubr.f32.gmra.mrb[0].mxu0 %v173
    %v248 = vpop.f32.mrb[0].mxu0
    %v249 = vadd.f32 %v164, %v248
    %v250 = vpop.f32.mrb[0].mxu0
    %251 = vmatprep.mubr.f32.mxu0 0.0
    %252 = vmatmul.mubr.f32.gmra.mrb[0].mxu0 %v176
    %v253 = vpop.f32.mrb[0].mxu0
    %v254 = vadd.f32 %v169, %v253
    %v255 = vpop.f32.mrb[0].mxu0
    %256 = vdwg.mxu0
    %v257 = vmax.f32 %v249, 0.0
    %v258 = vmax.f32 %v254, 0.0
    %v259 = vld [vmem:[%s5] sm:$0xf]
    %v260 = vld [vmem:[%s6] sm:$0xf]
    %262 = vset.pattern.permute.xlu0 0
    %263 = vperm.xlu0 %262, %v260
    %v264 = vpop.permute.xlu0 %263
    %vm266 = vcmask 97280
    %v268 = vsel %vm266, %v259, 0
    %v271 = vsel %vm178, %v258, 0
    %273 = vmatprep.subr.mxu0 0.0
    %274 = vmatpush1.msra.mxu0 %v257
    %275 = vmatprep.subr.mxu0 0.0
    %276 = vmatpush1.msra.mxu0 %v271
    %277 = vmatprep.subr.mxu0 0.0
    %278 = vmatpush1.msra.mxu0 0.0
    %279 = vmatprep.subr.mxu0 0.0
    %280 = vmatpush1.msra.mxu0 0.0
    %281 = vmatprep.subr.mxu0 0.0
    %282 = vmatpush1.msra.mxu0 0.0
    %283 = vmatprep.subr.mxu0 0.0
    %284 = vmatpush1.msra.mxu0 0.0
    %285 = vmatprep.subr.mxu0 0.0
    %286 = vmatpush1.msra.mxu0 0.0
    %287 = vmatprep.subr.mxu0 0.0
    %288 = vmatpush1.msra.mxu0 0.0
    %289 = vmatprep.subr.mxu0 0.0
    %290 = vmatpush1.msra.mxu0 0.0
    %291 = vmatprep.subr.mxu0 0.0
    %292 = vmatpush1.msra.mxu0 0.0
    %293 = vmatprep.subr.mxu0 0.0
    %294 = vmatpush1.msra.mxu0 0.0
    %295 = vmatprep.subr.mxu0 0.0
    %296 = vmatpush1.msra.mxu0 0.0
    %297 = vmatprep.subr.mxu0 0.0
    %298 = vmatpush1.msra.mxu0 0.0
    %299 = vmatprep.subr.mxu0 0.0
    %300 = vmatpush1.msra.mxu0 0.0
    %301 = vmatprep.subr.mxu0 0.0
    %302 = vmatpush1.msra.mxu0 0.0
    %303 = vmatprep.subr.mxu0 0.0
    %304 = vmatpush1.msra.mxu0 0.0
    %305 = vmatprep.subr.mxu0 0.0
    %306 = vmatpush1.msra.mxu0 0.0
    %307 = vmatprep.subr.mxu0 0.0
    %308 = vmatpush1.msra.mxu0 0.0
    %309 = vmatprep.subr.mxu0 0.0
    %310 = vmatpush1.msra.mxu0 0.0
    %311 = vmatprep.subr.mxu0 0.0
    %312 = vmatpush1.msra.mxu0 0.0
    %313 = vmatprep.subr.mxu0 0.0
    %314 = vmatpush1.msra.mxu0 0.0
    %315 = vmatprep.subr.mxu0 0.0
    %316 = vmatpush1.msra.mxu0 0.0
    %317 = vmatprep.subr.mxu0 0.0
    %318 = vmatpush1.msra.mxu0 0.0
    %319 = vmatprep.subr.mxu0 0.0
    %320 = vmatpush1.msra.mxu0 0.0
    %321 = vmatprep.subr.mxu0 0.0
    %322 = vmatpush1.msra.mxu0 0.0
    %323 = vmatprep.subr.mxu0 0.0
    %324 = vmatpush1.msra.mxu0 0.0
    %325 = vmatprep.subr.mxu0 0.0
    %326 = vmatpush1.msra.mxu0 0.0
    %327 = vmatprep.subr.mxu0 0.0
    %328 = vmatpush1.msra.mxu0 0.0
    %329 = vmatprep.subr.mxu0 0.0
    %330 = vmatpush1.msra.mxu0 0.0
    %331 = vmatprep.subr.mxu0 0.0
    %332 = vmatpush1.msra.mxu0 0.0
    %333 = vmatprep.subr.mxu0 0.0
    %334 = vmatpush1.msra.mxu0 0.0
    %335 = vmatprep.subr.mxu0 0.0
    %336 = vmatpush1.msra.mxu0 0.0
    %337 = vmatprep.mubr.f32.mxu0 0.0
    %338 = vmatmul.mubr.f32.gmra.mrb[0].mxu0 %v268
    %v339 = vpop.f32.mrb[0].mxu0
    %v340 = vadd.f32 %v264, %v339
    %v341 = vpop.f32.mrb[0].mxu0
    %342 = vdwg.mxu0
    %v343 = vxor.u32 %v340, 2147483648
    %v344 = vmul.f32 %v343, 1.442695
    %v345 = vpow.pop %v344
    %v346 = vadd.f32 %v345, 1.0
    %v347 = vrcp.pop %v346
    %v348 = vmul.f32 1.0, %v347
    %vm349 = vcmask 60416
    %350 = vst.msk [vmem:[#allocation5] sm:$0xf] %vm349, %v348
    // Predicated region
    $region34: #{tpu_custom_call.1} parent=1 // pred_check
      _
    $region35: #{tpu_custom_call.1} parent=1 // pred_check_branch
      %352 = sbr.rel (0) target = $region37
    $region36: #{tpu_custom_call.1} parent=1 // pred_region
      %s354 = ssub.s32 64, 64
      %355 = vsyncadd [#allocation4], %s354
      %s357 = sshll.u32 [#allocation5], 4
      %s358 = int_to_ptr.vmem [resolvable:$true] %s357
      %360 = dma.vmem_to_hbm [thread:$0]  %s358, 64, %s7, [#allocation4]
    $region37: #{tpu_custom_call.1} parent=1 // pred_fallthru
      _
    // Predicated region
    $region38: #{tpu_custom_call.1} parent=1 // pred_check
      _
    $region39: #{tpu_custom_call.1} parent=1 // pred_check_branch
      %362 = sbr.rel (0) target = $region41
    $region40: #{tpu_custom_call.1} parent=1 // pred_region
      %363 = dma.done [#allocation4], 64
    $region41: #{tpu_custom_call.1} parent=1 // pred_fallthru
      _
    %364 = vsyncpa [#allocation3], 1
    %365 = vsyncpa [#allocation4], 1

</llo_original>
